<compile_context>
chip_gen: v5e
topology: v5e:2x2
jax: 0.10.0
libtpu: 0.0.40
codegen_flags: <defaults>
</compile_context>

<pallas_src>
import jax
import jax.numpy as jnp
from jax.experimental import pallas as pl
from jax.experimental.pallas import tpu as pltpu


_IN_DIM = 90
_K_PAD = 128          # first-matmul contraction dim, zero-padded to a full 128-lane vreg
_H1 = 512
_H2 = 256
_BIAS_LANE = _IN_DIM  # lane 90 of the padded x carries a 1.0 -> b1 folds into w1 row 90


def _round_up(n, m):
    return ((n + m - 1) // m) * m


def _swish_f32(z):
    # sigmoid via tanh: one EUP op per element instead of exp + divide.
    return z * (0.5 * jnp.tanh(0.5 * z) + 0.5)


def modele_kernel(x_ref, w1_ref, w2_ref, b2_ref, o_ref, xk_ref):
    # Build the (TB, 128) bf16 MXU operand in VMEM scratch (no wrapper pad/cast pass):
    #   lanes 0..89   = x, cast f32 -> bf16 in-kernel
    #   lane  90      = 1.0   (so w1_t row 90 == b1 adds the bias inside the MXU)
    #   lanes 91..127 = 0.0
    # Every lane is rewritten each grid step, so this is megacore-safe.
    xk_ref[:, :_IN_DIM] = x_ref[...].astype(jnp.bfloat16)
    tb = xk_ref.shape[0]
    pad = _K_PAD - _IN_DIM
    col = jax.lax.broadcasted_iota(jnp.int32, (tb, pad), 1)
    xk_ref[:, _IN_DIM:] = jnp.where(col == 0, 1.0, 0.0).astype(jnp.bfloat16)

    # net[0]: Linear(90->512) + b1 (folded), bf16 MXU feed, f32 accumulate.
    h = jnp.dot(xk_ref[...], w1_ref[...], preferred_element_type=jnp.float32)
    # swish -> ReLU (net[1]) -> swish, fused in f32 (tanh on EUP, mul/max on VALU).
    h = _swish_f32(h)
    h = jnp.maximum(h, 0.0)
    h = _swish_f32(h)
    # net[2]: Linear(512->256), bf16 MXU feed, f32 accumulate, f32 bias add.
    h = jnp.dot(h.astype(jnp.bfloat16), w2_ref[...],
                preferred_element_type=jnp.float32)
    h = h + b2_ref[...]
    # swish -> ReLU (net[3])
    h = _swish_f32(h)
    o_ref[...] = jnp.maximum(h, 0.0).astype(o_ref.dtype)


def _pick_tb(batch, tb_max):
    """Batch tile: >=2 grid steps for real batches (v7x megacore), 8-row aligned,
    MXU-friendly multiple of 256 when possible, capped at tb_max (<=2048 keeps the
    live set well inside v7x's 64 MiB VMEM; v5e/v6e could go larger)."""
    if batch <= 8:
        return 8
    half = -(-batch // 2)                                  # ceil(batch / 2)
    tb = min(tb_max, _round_up(half, 256), _round_up(batch, 8))
    return max(_round_up(tb, 8), 8)


def modele_forward(x, w1, b1, w2, b2, *, tb_max=2048, out_dtype=jnp.float32):
    """x: (B, 90) f32.  w1: (512, 90), b1: (512,), w2: (256, 512), b2: (256,).

    out_dtype=jnp.bfloat16 halves the dominant HBM stream if the consumer
    tolerates ~1e-2 level error; default f32 matches PyTorch semantics.
    """
    B = x.shape[0]
    TB = _pick_tb(B, tb_max)
    grid = (pl.cdiv(B, TB),)                               # ragged last block clipped by Pallas

    x = jnp.asarray(x, jnp.float32)                        # streamed raw; cast happens in-kernel

    # w1^T padded 90 -> 128; row 90 carries b1 (bias folded into the MXU); rest zero.
    w1_t = jnp.zeros((_K_PAD, _H1), jnp.float32)
    w1_t = w1_t.at[:_IN_DIM].set(jnp.asarray(w1, jnp.float32).T)
    w1_t = w1_t.at[_BIAS_LANE].set(jnp.asarray(b1, jnp.float32))
    w1_t = w1_t.astype(jnp.bfloat16)                       # (128, 512)
    w2_t = jnp.asarray(w2, jnp.float32).T.astype(jnp.bfloat16)   # (512, 256)
    b2_r = jnp.asarray(b2, jnp.float32)[None, :]           # (1, 256), stays f32

    out_bytes = jnp.dtype(out_dtype).itemsize
    cost = pl.CostEstimate(
        flops=2 * B * (_K_PAD * _H1 + _H1 * _H2),
        transcendentals=B * (2 * _H1 + _H2),               # one tanh per sigmoid
        bytes_accessed=(B * _IN_DIM * 4 + B * _H2 * out_bytes
                        + w1_t.size * 2 + w2_t.size * 2 + b2_r.size * 4),
    )

    out = pl.pallas_call(
        modele_kernel,
        out_shape=jax.ShapeDtypeStruct((B, _H2), out_dtype),
        grid=grid,
        in_specs=[
            pl.BlockSpec((TB, _IN_DIM), lambda i: (i, 0)),   # x tile (pipelined)
            pl.BlockSpec((_K_PAD, _H1), lambda i: (0, 0)),   # w1 (+ b1 row): VMEM-resident
            pl.BlockSpec((_H1, _H2), lambda i: (0, 0)),      # w2: VMEM-resident
            pl.BlockSpec((1, _H2), lambda i: (0, 0)),        # b2: VMEM-resident
        ],
        out_specs=pl.BlockSpec((TB, _H2), lambda i: (i, 0)),
        scratch_shapes=[pltpu.VMEM((TB, _K_PAD), jnp.bfloat16)],  # padded bf16 x operand
        compiler_params=pltpu.CompilerParams(
            dimension_semantics=("parallel",),               # shard grid on v7x's 2 TCs
            vmem_limit_bytes=48 * 1024 * 1024,               # safe under v7x's 64 MiB
        ),
        cost_estimate=cost,
    )(x, w1_t, w2_t, b2_r)
    return out


# ----------------------------- references ----------------------------------

def modele_reference(x, w1, b1, w2, b2):
    """Pure-JAX f32 reference matching the PyTorch forward exactly."""
    sw = lambda z: z * jax.nn.sigmoid(z)
    h = x @ w1.T + b1
    h = sw(h)
    h = jnp.maximum(h, 0.0)
    h = sw(h)
    h = h @ w2.T + b2
    h = sw(h)
    return jnp.maximum(h, 0.0)


def modele_reference_bf16(x, w1, b1, w2, b2):
    """Reference emulating the kernel's numerics (bf16 MXU feed, folded b1,
    tanh-form sigmoid, f32 accumulation)."""
    bf = jnp.bfloat16
    B = x.shape[0]
    sw = lambda z: z * (0.5 * jnp.tanh(0.5 * z) + 0.5)
    xk = jnp.concatenate(
        [x, jnp.ones((B, 1), jnp.float32),
         jnp.zeros((B, _K_PAD - _IN_DIM - 1), jnp.float32)], axis=-1).astype(bf)
    w1k = jnp.concatenate(
        [w1.T, b1[None, :],
         jnp.zeros((_K_PAD - _IN_DIM - 1, _H1), jnp.float32)], axis=0).astype(bf)
    h = jnp.dot(xk, w1k, preferred_element_type=jnp.float32)
    h = sw(h)
    h = jnp.maximum(h, 0.0)
    h = sw(h)
    h = jnp.dot(h.astype(bf), w2.T.astype(bf), preferred_element_type=jnp.float32) + b2
    h = sw(h)
    return jnp.maximum(h, 0.0)


def _init_linear(key, out_f, in_f):
    # Deterministic init mimicking PyTorch's default U(-1/sqrt(fan_in), 1/sqrt(fan_in)).
    kw, kb = jax.random.split(key)
    bound = 1.0 / jnp.sqrt(jnp.float32(in_f))
    w = jax.random.uniform(kw, (out_f, in_f), jnp.float32, -bound, bound)
    b = jax.random.uniform(kb, (out_f,), jnp.float32, -bound, bound)
    return w, b


if __name__ == "__main__":
    key = jax.random.PRNGKey(0)
    k_x, k_x2, k_l0, k_l2 = jax.random.split(key, 4)

    # Only net[0] (90->512) and net[2] (512->256) are reached by forward().
    w1, b1 = _init_linear(k_l0, _H1, _IN_DIM)
    w2, b2 = _init_linear(k_l2, _H2, _H1)
    # TODO(synk): net[4] (256->128), net[5] (ReLU), net[6] (128->output_dim) are
    # constructed in __init__ but never executed by forward(), so they are
    # intentionally not instantiated here.

    # Demo 1: small batch, f32 output (PyTorch semantics).
    B = 8
    x = jax.random.normal(k_x, (B, _IN_DIM), jnp.float32)
    out = jax.block_until_ready(modele_forward(x, w1, b1, w2, b2))
    assert out.shape == (B, _H2) and out.dtype == jnp.float32, (out.shape, out.dtype)
    ref16 = modele_reference_bf16(x, w1, b1, w2, b2)
    ref32 = modele_reference(x, w1, b1, w2, b2)
    assert jnp.allclose(out, ref16, atol=5e-3, rtol=5e-3), \
        float(jnp.max(jnp.abs(out - ref16)))
    assert jnp.allclose(out, ref32, atol=3e-2, rtol=3e-2), \
        float(jnp.max(jnp.abs(out - ref32)))

    # Demo 2: ragged batch (exercises the cdiv grid's clipped last block) with a
    # bf16 output stream (halves the dominant HBM write).
    B2 = 20
    x2 = jax.random.normal(k_x2, (B2, _IN_DIM), jnp.float32)
    out2 = jax.block_until_ready(
        modele_forward(x2, w1, b1, w2, b2, out_dtype=jnp.bfloat16))
    assert out2.shape == (B2, _H2) and out2.dtype == jnp.bfloat16, (out2.shape, out2.dtype)
    ref16_2 = modele_reference_bf16(x2, w1, b1, w2, b2)
    assert jnp.allclose(out2.astype(jnp.float32), ref16_2, atol=2e-2, rtol=2e-2), \
        float(jnp.max(jnp.abs(out2.astype(jnp.float32) - ref16_2)))

    print("KERNEL_OK")
</pallas_src>

<mosaic_0001>
module attributes {stable_mosaic.version = 11 : i64} {
  func.func @modele_kernel(%arg0: i32, %arg1: memref<8x90xf32, #tpu.memory_space<vmem>>, %arg2: memref<128x512xbf16, #tpu.memory_space<vmem>>, %arg3: memref<512x256xbf16, #tpu.memory_space<vmem>>, %arg4: memref<1x256xf32, #tpu.memory_space<vmem>>, %arg5: memref<8x256xf32, #tpu.memory_space<vmem>>, %arg6: memref<8x128xbf16, #tpu.memory_space<vmem>>) attributes {dimension_semantics = [#tpu.dimension_semantics<parallel>], iteration_bounds = array<i64: 1>, scalar_prefetch = 0 : i64, scratch_operands = 1 : i64, tpu.core_type = #tpu.core_type<tc>, window_params = [{transform_indices = @transform_0, window_bounds = array<i64: 8, 90>}, {pipeline_mode = #tpu.pipeline_mode<synchronous>, transform_indices = @transform_1, window_bounds = array<i64: 128, 512>}, {pipeline_mode = #tpu.pipeline_mode<synchronous>, transform_indices = @transform_2, window_bounds = array<i64: 512, 256>}, {pipeline_mode = #tpu.pipeline_mode<synchronous>, transform_indices = @transform_3, window_bounds = array<i64: 1, 256>}, {transform_indices = @transform_4, window_bounds = array<i64: 8, 256>}]} {
    %c0 = arith.constant 0 : index
    %c0_0 = arith.constant 0 : index
    %0 = vector.load %arg1[%c0, %c0_0] : memref<8x90xf32, #tpu.memory_space<vmem>>, vector<8x90xf32>
    %1 = arith.truncf %0 : vector<8x90xf32> to vector<8x90xbf16>
    %c0_1 = arith.constant 0 : index
    %c0_2 = arith.constant 0 : index
    %2 = vector.load %arg6[%c0_1, %c0_2] : memref<8x128xbf16, #tpu.memory_space<vmem>>, vector<8x90xbf16>
    tpu.vector_store %arg6[%c0_1, %c0_2], %1 {strides = array<i32>} : memref<8x128xbf16, #tpu.memory_space<vmem>>, vector<8x90xbf16>,
    %3 = tpu.iota {dimensions = array<i32: 1>} : vector<8x38xi32>
    %c0_i32 = arith.constant 0 : i32
    %4 = vector.broadcast %c0_i32 : i32 to vector<8x38xi32>
    %5 = arith.cmpi eq, %3, %4 : vector<8x38xi32>
    %cst = arith.constant 1.000000e+00 : f32
    %cst_3 = arith.constant 0.000000e+00 : f32
    %6 = vector.broadcast %cst : f32 to vector<8x38xf32>
    %7 = vector.broadcast %cst_3 : f32 to vector<8x38xf32>
    %8 = arith.select %5, %6, %7 : vector<8x38xi1>, vector<8x38xf32>
    %9 = arith.truncf %8 : vector<8x38xf32> to vector<8x38xbf16>
    %c0_4 = arith.constant 0 : index
    %c90 = arith.constant 90 : index
    %10 = vector.load %arg6[%c0_4, %c90] : memref<8x128xbf16, #tpu.memory_space<vmem>>, vector<8x38xbf16>
    tpu.vector_store %arg6[%c0_4, %c90], %9 {strides = array<i32>} : memref<8x128xbf16, #tpu.memory_space<vmem>>, vector<8x38xbf16>,
    %c0_5 = arith.constant 0 : index
    %c0_6 = arith.constant 0 : index
    %11 = vector.load %arg6[%c0_5, %c0_6] : memref<8x128xbf16, #tpu.memory_space<vmem>>, vector<8x128xbf16>
    %c0_7 = arith.constant 0 : index
    %c0_8 = arith.constant 0 : index
    %12 = vector.load %arg2[%c0_7, %c0_8] : memref<128x512xbf16, #tpu.memory_space<vmem>>, vector<128x512xbf16>
    %cst_9 = arith.constant dense<0.000000e+00> : vector<8x512xf32>
    %13 = tpu.matmul %11, %12, %cst_9 {dimension_numbers = #tpu.dot_dimension_numbers<[1], [0], [0], [1], [0, 0, 1, 1], [], []>} : vector<8x128xbf16>, vector<128x512xbf16>, vector<8x512xf32> -> vector<8x512xf32>
    %cst_10 = arith.constant 5.000000e-01 : f32
    %14 = vector.broadcast %cst_10 : f32 to vector<8x512xf32>
    %15 = arith.mulf %14, %13 : vector<8x512xf32>
    %16 = math.tanh %15 : vector<8x512xf32>
    %cst_11 = arith.constant 5.000000e-01 : f32
    %17 = vector.broadcast %cst_11 : f32 to vector<8x512xf32>
    %18 = arith.mulf %17, %16 : vector<8x512xf32>
    %cst_12 = arith.constant 5.000000e-01 : f32
    %19 = vector.broadcast %cst_12 : f32 to vector<8x512xf32>
    %20 = arith.addf %18, %19 : vector<8x512xf32>
    %21 = arith.mulf %13, %20 : vector<8x512xf32>
    %cst_13 = arith.constant 0.000000e+00 : f32
    %22 = vector.broadcast %cst_13 : f32 to vector<8x512xf32>
    %23 = arith.maximumf %21, %22 : vector<8x512xf32>
    %cst_14 = arith.constant 5.000000e-01 : f32
    %24 = vector.broadcast %cst_14 : f32 to vector<8x512xf32>
    %25 = arith.mulf %24, %23 : vector<8x512xf32>
    %26 = math.tanh %25 : vector<8x512xf32>
    %cst_15 = arith.constant 5.000000e-01 : f32
    %27 = vector.broadcast %cst_15 : f32 to vector<8x512xf32>
    %28 = arith.mulf %27, %26 : vector<8x512xf32>
    %cst_16 = arith.constant 5.000000e-01 : f32
    %29 = vector.broadcast %cst_16 : f32 to vector<8x512xf32>
    %30 = arith.addf %28, %29 : vector<8x512xf32>
    %31 = arith.mulf %23, %30 : vector<8x512xf32>
    %32 = arith.truncf %31 : vector<8x512xf32> to vector<8x512xbf16>
    %c0_17 = arith.constant 0 : index
    %c0_18 = arith.constant 0 : index
    %33 = vector.load %arg3[%c0_17, %c0_18] : memref<512x256xbf16, #tpu.memory_space<vmem>>, vector<512x256xbf16>
    %cst_19 = arith.constant dense<0.000000e+00> : vector<8x256xf32>
    %34 = tpu.matmul %32, %33, %cst_19 {dimension_numbers = #tpu.dot_dimension_numbers<[1], [0], [0], [1], [0, 0, 1, 1], [], []>} : vector<8x512xbf16>, vector<512x256xbf16>, vector<8x256xf32> -> vector<8x256xf32>
    %c0_20 = arith.constant 0 : index
    %c0_21 = arith.constant 0 : index
    %35 = vector.load %arg4[%c0_20, %c0_21] : memref<1x256xf32, #tpu.memory_space<vmem>>, vector<1x256xf32>
    %36 = vector.broadcast %35 : vector<1x256xf32> to vector<8x256xf32>
    %37 = arith.addf %34, %36 : vector<8x256xf32>
    %cst_22 = arith.constant 5.000000e-01 : f32
    %38 = vector.broadcast %cst_22 : f32 to vector<8x256xf32>
    %39 = arith.mulf %38, %37 : vector<8x256xf32>
    %40 = math.tanh %39 : vector<8x256xf32>
    %cst_23 = arith.constant 5.000000e-01 : f32
    %41 = vector.broadcast %cst_23 : f32 to vector<8x256xf32>
    %42 = arith.mulf %41, %40 : vector<8x256xf32>
    %cst_24 = arith.constant 5.000000e-01 : f32
    %43 = vector.broadcast %cst_24 : f32 to vector<8x256xf32>
    %44 = arith.addf %42, %43 : vector<8x256xf32>
    %45 = arith.mulf %37, %44 : vector<8x256xf32>
    %cst_25 = arith.constant 0.000000e+00 : f32
    %46 = vector.broadcast %cst_25 : f32 to vector<8x256xf32>
    %47 = arith.maximumf %45, %46 : vector<8x256xf32>
    %c0_26 = arith.constant 0 : index
    %c0_27 = arith.constant 0 : index
    %48 = vector.load %arg5[%c0_26, %c0_27] : memref<8x256xf32, #tpu.memory_space<vmem>>, vector<8x256xf32>
    tpu.vector_store %arg5[%c0_26, %c0_27], %47 {strides = array<i32>} : memref<8x256xf32, #tpu.memory_space<vmem>>, vector<8x256xf32>,
    return
  }
  func.func @transform_0(%arg0: i32) -> (i32, i32) {
    %c0_i32 = arith.constant 0 : i32
    %c0_i32_0 = arith.constant 0 : i32
    return %arg0, %c0_i32 : i32, i32
  }
  func.func @transform_1(%arg0: i32) -> (i32, i32) {
    %c0_i32 = arith.constant 0 : i32
    %c0_i32_0 = arith.constant 0 : i32
    %c0_i32_1 = arith.constant 0 : i32
    return %c0_i32, %c0_i32_0 : i32, i32
  }
  func.func @transform_2(%arg0: i32) -> (i32, i32) {
    %c0_i32 = arith.constant 0 : i32
    %c0_i32_0 = arith.constant 0 : i32
    %c0_i32_1 = arith.constant 0 : i32
    return %c0_i32, %c0_i32_0 : i32, i32
  }
  func.func @transform_3(%arg0: i32) -> (i32, i32) {
    %c0_i32 = arith.constant 0 : i32
    %c0_i32_0 = arith.constant 0 : i32
    %c0_i32_1 = arith.constant 0 : i32
    return %c0_i32, %c0_i32_0 : i32, i32
  }
  func.func @transform_4(%arg0: i32) -> (i32, i32) {
    %c0_i32 = arith.constant 0 : i32
    %c0_i32_0 = arith.constant 0 : i32
    return %arg0, %c0_i32 : i32, i32
  }
}

</mosaic_0001>

<llo_original>
// kernel: tpu_custom_call.1
$region0: #{tpu_custom_call.1}
  #allocation0 [shape = 'u32[]', space=smem, size = 0x4, offset = 0x4, fixed_abs, tag = 'smem constant byte address 0x4 - core index']
  #allocation1 [shape = 'u32[72,128]{1,0:T(1,128)}', space=vmem, size = 0x9000, scoped, tag = 'internal scratch']
  #allocation2 [shape = 'bf16[8,128]{1,0:T(8,128)(2,1)}', space=vmem, size = 0x800, scoped, tag = 'scratch operand']
  %s0 = inlined_call_operand.hbm [shape: f32[8,90], index: 0, kind: input, shape index: {}]
  %s1 = inlined_call_operand.hbm [shape: bf16[128,512], index: 1, kind: input, shape index: {}]
  %s2 = inlined_call_operand.hbm [shape: bf16[512,256], index: 2, kind: input, shape index: {}]
  %s3 = inlined_call_operand.vmem [shape: f32[1,256], index: 3, kind: input, shape index: {}]
  %s4 = inlined_call_operand.hbm [shape: f32[8,256], index: 4, kind: output, shape index: {}]
  %s5 = sld [smem:[#allocation0]]
  $region38: #{tpu_custom_call.1} parent=0
    _
  %s7 = ssub.s32 1, %s5
  %s8 = scalar_select 0, %s7, %s5
  $region1: #{tpu_custom_call.1} parent=0
    #allocation3 [shape = 'u8[4096]{0}', space=vmem, size = 0x1000, scoped, tag = 'input window, operand 0, single buffered']
    #allocation4 [shape = 's32[1]{0}', space=sflag, size = 0x4, scoped, tag = 'scoped memory for tpu_custom_call.1']
    #allocation5 [shape = 's32[1]{0}', space=sflag, size = 0x4, scoped, tag = 'scoped memory for tpu_custom_call.1']
    #allocation6 [shape = 'u8[131072]{0}', space=vmem, size = 0x20000, scoped, tag = 'input window, operand 1, single buffered']
    #allocation7 [shape = 's32[1]{0}', space=sflag, size = 0x4, scoped, tag = 'scoped memory for tpu_custom_call.1']
    #allocation8 [shape = 'u8[262144]{0}', space=vmem, size = 0x40000, scoped, tag = 'input window, operand 2, single buffered']
    #allocation9 [shape = 'u8[8192]{0}', space=vmem, size = 0x2000, scoped, tag = 'output window, operand 0, single buffered']
    %9 = vsyncpa [#allocation4], 0
    %10 = vsyncpa [#allocation7], 0
    %11 = vsyncpa [#allocation5], 0
    // Predicated region
    $region2: #{tpu_custom_call.1} parent=1 // pred_check
      _
    $region3: #{tpu_custom_call.1} parent=1 // pred_check_branch
      %13 = sbr.rel (0) target = $region5
    $region4: #{tpu_custom_call.1} parent=1 // pred_region
      %15 = vsyncadd [#allocation4], 0
      %s17 = sshll.u32 %s0, 4
      %s18 = int_to_ptr.hbm [resolvable:$true] %s17
      %s19 = sshll.u32 [#allocation3], 4
      %s20 = int_to_ptr.vmem [resolvable:$true] %s19
      %22 = dma.hbm_to_vmem [thread:$0]  %s18, 128, %s20, [#allocation4]
    $region5: #{tpu_custom_call.1} parent=1 // pred_fallthru
      _
    // Predicated region
    $region6: #{tpu_custom_call.1} parent=1 // pred_check
      _
    $region7: #{tpu_custom_call.1} parent=1 // pred_check_branch
      %24 = sbr.rel (0) target = $region9
    $region8: #{tpu_custom_call.1} parent=1 // pred_region
      %26 = vsyncadd [#allocation7], 0
      %s27 = sshll.u32 %s1, 4
      %s28 = int_to_ptr.hbm [resolvable:$true] %s27
      %s29 = sshll.u32 [#allocation6], 4
      %s30 = int_to_ptr.vmem [resolvable:$true] %s29
      %35 = dma.hbm_to_vmem [thread:$0]  %s28, 4096, %s30, [#allocation7], 256, 256, 16
    $region9: #{tpu_custom_call.1} parent=1 // pred_fallthru
      _
    // Predicated region
    $region10: #{tpu_custom_call.1} parent=1 // pred_check
      _
    $region11: #{tpu_custom_call.1} parent=1 // pred_check_branch
      %37 = sbr.rel (0) target = $region13
    $region12: #{tpu_custom_call.1} parent=1 // pred_region
      %39 = vsyncadd [#allocation7], 0
      %s40 = sshll.u32 %s2, 4
      %s41 = int_to_ptr.hbm [resolvable:$true] %s40
      %s42 = sshll.u32 [#allocation8], 4
      %s43 = int_to_ptr.vmem [resolvable:$true] %s42
      %48 = dma.hbm_to_vmem [thread:$0]  %s41, 8192, %s43, [#allocation7], 128, 128, 8
    $region13: #{tpu_custom_call.1} parent=1 // pred_fallthru
      _
    // Predicated region
    $region14: #{tpu_custom_call.1} parent=1 // pred_check
      _
    $region15: #{tpu_custom_call.1} parent=1 // pred_check_branch
      %50 = sbr.rel (0) target = $region17
    $region16: #{tpu_custom_call.1} parent=1 // pred_region
      _
    $region17: #{tpu_custom_call.1} parent=1 // pred_fallthru
      _
    // Predicated region
    $region18: #{tpu_custom_call.1} parent=1 // pred_check
      _
    $region19: #{tpu_custom_call.1} parent=1 // pred_check_branch
      %52 = sbr.rel (0) target = $region21
    $region20: #{tpu_custom_call.1} parent=1 // pred_region
      %54 = dma.done [#allocation4], 128
    $region21: #{tpu_custom_call.1} parent=1 // pred_fallthru
      _
    // Predicated region
    $region22: #{tpu_custom_call.1} parent=1 // pred_check
      _
    $region23: #{tpu_custom_call.1} parent=1 // pred_check_branch
      %56 = sbr.rel (0) target = $region25
    $region24: #{tpu_custom_call.1} parent=1 // pred_region
      %58 = dma.done [#allocation7], 4096
    $region25: #{tpu_custom_call.1} parent=1 // pred_fallthru
      _
    // Predicated region
    $region26: #{tpu_custom_call.1} parent=1 // pred_check
      _
    $region27: #{tpu_custom_call.1} parent=1 // pred_check_branch
      %60 = sbr.rel (0) target = $region29
    $region28: #{tpu_custom_call.1} parent=1 // pred_region
      %62 = dma.done [#allocation7], 8192
    $region29: #{tpu_custom_call.1} parent=1 // pred_fallthru
      _
    %v63 = vld [vmem:[#allocation3] sm:$0xff]
    %v64 = vpack.c.bf16 %v63, %v63
    %vm65 = vcmask 732160
    %66 = vst.msk [vmem:[#allocation2] sm:$0xf] %vm65, %v64
    %v67 = vlaneseq
    %v68 = vand.u32 %v67, 127
    %vm69 = vcmp.eq.s32.totalorder %v68, 0
    %v70 = vsel %vm69, 1.0, 0.0
    %v71 = vpack.c.bf16 %v70, %v70
    %73 = vrot.lane.b32.xlu0 %v71, 90
    %v74 = vpop.permute.xlu0 %73
    %vm76 = vcmask 1044176
    %77 = vst.msk [vmem:[#allocation2] sm:$0xf] %vm76, %v74
    %v78 = vld [vmem:[#allocation2] sm:$0xf]
    %v79 = vld [vmem:[#allocation6] sm:$0xff]
    %v80 = vld [vmem:[#allocation6 + $0x8] sm:$0xff]
    %v81 = vld [vmem:[#allocation6 + $0x10] sm:$0xff]
    %v82 = vld [vmem:[#allocation6 + $0x18] sm:$0xff]
    %v83 = vld [vmem:[#allocation6 + $0x20] sm:$0xff]
    %v84 = vld [vmem:[#allocation6 + $0x28] sm:$0xff]
    %v85 = vld [vmem:[#allocation6 + $0x30] sm:$0xff]
    %v86 = vld [vmem:[#allocation6 + $0x38] sm:$0xff]
    %v87 = vld [vmem:[#allocation6 + $0x40] sm:$0xff]
    %v88 = vld [vmem:[#allocation6 + $0x48] sm:$0xff]
    %v89 = vld [vmem:[#allocation6 + $0x50] sm:$0xff]
    %v90 = vld [vmem:[#allocation6 + $0x58] sm:$0xff]
    %v91 = vld [vmem:[#allocation6 + $0x60] sm:$0xff]
    %v92 = vld [vmem:[#allocation6 + $0x68] sm:$0xff]
    %v93 = vld [vmem:[#allocation6 + $0x70] sm:$0xff]
    %v94 = vld [vmem:[#allocation6 + $0x78] sm:$0xff]
    %v95 = vld [vmem:[#allocation6 + $0x80] sm:$0xff]
    %v96 = vld [vmem:[#allocation6 + $0x88] sm:$0xff]
    %v97 = vld [vmem:[#allocation6 + $0x90] sm:$0xff]
    %v98 = vld [vmem:[#allocation6 + $0x98] sm:$0xff]
    %v99 = vld [vmem:[#allocation6 + $0xa0] sm:$0xff]
    %v100 = vld [vmem:[#allocation6 + $0xa8] sm:$0xff]
    %v101 = vld [vmem:[#allocation6 + $0xb0] sm:$0xff]
    %v102 = vld [vmem:[#allocation6 + $0xb8] sm:$0xff]
    %v103 = vld [vmem:[#allocation6 + $0xc0] sm:$0xff]
    %v104 = vld [vmem:[#allocation6 + $0xc8] sm:$0xff]
    %v105 = vld [vmem:[#allocation6 + $0xd0] sm:$0xff]
    %v106 = vld [vmem:[#allocation6 + $0xd8] sm:$0xff]
    %v107 = vld [vmem:[#allocation6 + $0xe0] sm:$0xff]
    %v108 = vld [vmem:[#allocation6 + $0xe8] sm:$0xff]
    %v109 = vld [vmem:[#allocation6 + $0xf0] sm:$0xff]
    %v110 = vld [vmem:[#allocation6 + $0xf8] sm:$0xff]
    %v143 = vunpack.c.l.b16 %v79
    %v144 = vunpack.c.h.b16 %v79
    %v145 = vunpack.c.l.b16 %v80
    %v146 = vunpack.c.h.b16 %v80
    %v147 = vunpack.c.l.b16 %v81
    %v148 = vunpack.c.h.b16 %v81
    %v149 = vunpack.c.l.b16 %v82
    %v150 = vunpack.c.h.b16 %v82
    %v151 = vunpack.c.l.b16 %v83
    %v152 = vunpack.c.h.b16 %v83
    %v153 = vunpack.c.l.b16 %v84
    %v154 = vunpack.c.h.b16 %v84
    %v155 = vunpack.c.l.b16 %v85
    %v156 = vunpack.c.h.b16 %v85
    %v157 = vunpack.c.l.b16 %v86
    %v158 = vunpack.c.h.b16 %v86
    %v159 = vunpack.c.l.b16 %v87
    %v160 = vunpack.c.h.b16 %v87
    %v161 = vunpack.c.l.b16 %v88
    %v162 = vunpack.c.h.b16 %v88
    %v163 = vunpack.c.l.b16 %v89
    %v164 = vunpack.c.h.b16 %v89
    %v165 = vunpack.c.l.b16 %v90
    %v166 = vunpack.c.h.b16 %v90
    %v167 = vunpack.c.l.b16 %v91
    %v168 = vunpack.c.h.b16 %v91
    %v169 = vunpack.c.l.b16 %v92
    %v170 = vunpack.c.h.b16 %v92
    %v171 = vunpack.c.l.b16 %v93
    %v172 = vunpack.c.h.b16 %v93
    %v173 = vunpack.c.l.b16 %v94
    %v174 = vunpack.c.h.b16 %v94
    %v175 = vunpack.c.l.b16 %v95
    %v176 = vunpack.c.h.b16 %v95
    %v177 = vunpack.c.l.b16 %v96
    %v178 = vunpack.c.h.b16 %v96
    %v179 = vunpack.c.l.b16 %v97
    %v180 = vunpack.c.h.b16 %v97
    %v181 = vunpack.c.l.b16 %v98
    %v182 = vunpack.c.h.b16 %v98
    %v183 = vunpack.c.l.b16 %v99
    %v184 = vunpack.c.h.b16 %v99
    %v185 = vunpack.c.l.b16 %v100
    %v186 = vunpack.c.h.b16 %v100
    %v187 = vunpack.c.l.b16 %v101
    %v188 = vunpack.c.h.b16 %v101
    %v189 = vunpack.c.l.b16 %v102
    %v190 = vunpack.c.h.b16 %v102
    %v191 = vunpack.c.l.b16 %v103
    %v192 = vunpack.c.h.b16 %v103
    %v193 = vunpack.c.l.b16 %v104
    %v194 = vunpack.c.h.b16 %v104
    %v195 = vunpack.c.l.b16 %v105
    %v196 = vunpack.c.h.b16 %v105
    %v197 = vunpack.c.l.b16 %v106
    %v198 = vunpack.c.h.b16 %v106
    %v199 = vunpack.c.l.b16 %v107
    %v200 = vunpack.c.h.b16 %v107
    %v201 = vunpack.c.l.b16 %v108
    %v202 = vunpack.c.h.b16 %v108
    %v203 = vunpack.c.l.b16 %v109
    %v204 = vunpack.c.h.b16 %v109
    %v205 = vunpack.c.l.b16 %v110
    %v206 = vunpack.c.h.b16 %v110
    %v207 = vpack.c.b16 %v147, %v143
    %v208 = vpack.c.b16 %v148, %v144
    %v209 = vpack.c.b16 %v149, %v145
    %v210 = vpack.c.b16 %v150, %v146
    %v211 = vpack.c.b16 %v155, %v151
    %v212 = vpack.c.b16 %v156, %v152
    %v213 = vpack.c.b16 %v157, %v153
    %v214 = vpack.c.b16 %v158, %v154
    %v215 = vpack.c.b16 %v163, %v159
    %v216 = vpack.c.b16 %v164, %v160
    %v217 = vpack.c.b16 %v165, %v161
    %v218 = vpack.c.b16 %v166, %v162
    %v219 = vpack.c.b16 %v171, %v167
    %v220 = vpack.c.b16 %v172, %v168
    %v221 = vpack.c.b16 %v173, %v169
    %v222 = vpack.c.b16 %v174, %v170
    %v223 = vpack.c.b16 %v179, %v175
    %v224 = vpack.c.b16 %v180, %v176
    %v225 = vpack.c.b16 %v181, %v177
    %v226 = vpack.c.b16 %v182, %v178
    %v227 = vpack.c.b16 %v187, %v183
    %v228 = vpack.c.b16 %v188, %v184
    %v229 = vpack.c.b16 %v189, %v185
    %v230 = vpack.c.b16 %v190, %v186
    %v231 = vpack.c.b16 %v195, %v191
    %v232 = vpack.c.b16 %v196, %v192
    %v233 = vpack.c.b16 %v197, %v193
    %v234 = vpack.c.b16 %v198, %v194
    %v235 = vpack.c.b16 %v203, %v199
    %v236 = vpack.c.b16 %v204, %v200
    %v237 = vpack.c.b16 %v205, %v201
    %v238 = vpack.c.b16 %v206, %v202
    %271 = vmatpush.bf16.msra.mxu0 %v235
    %272 = vmatpush.bf16.msra.mxu0 %v231
    %273 = vmatpush.bf16.msra.mxu0 %v227
    %274 = vmatpush.bf16.msra.mxu0 %v223
    %275 = vmatpush.bf16.msra.mxu0 %v219
    %276 = vmatpush.bf16.msra.mxu0 %v215
    %277 = vmatpush.bf16.msra.mxu0 %v211
    %278 = vmatpush.bf16.msra.mxu0 %v207
    %279 = vmatmul.bf16.gmra.mxu0 %v78
    %v280 = vpop.f32.mrf.mxu0
    %v281 = vadd.f32 0.0, %v280
    %v282 = vpop.f32.mrf.mxu0
    %283 = vdwg.mxu0
    %284 = vmatpush.bf16.msra.mxu0 %v236
    %285 = vmatpush.bf16.msra.mxu0 %v232
    %286 = vmatpush.bf16.msra.mxu0 %v228
    %287 = vmatpush.bf16.msra.mxu0 %v224
    %288 = vmatpush.bf16.msra.mxu0 %v220
    %289 = vmatpush.bf16.msra.mxu0 %v216
    %290 = vmatpush.bf16.msra.mxu0 %v212
    %291 = vmatpush.bf16.msra.mxu0 %v208
    %292 = vmatmul.bf16.gmra.mxu0 %v78
    %v293 = vpop.f32.mrf.mxu0
    %v294 = vadd.f32 0.0, %v293
    %v295 = vpop.f32.mrf.mxu0
    %296 = vdwg.mxu0
    %297 = vmatpush.bf16.msra.mxu0 %v237
    %298 = vmatpush.bf16.msra.mxu0 %v233
    %299 = vmatpush.bf16.msra.mxu0 %v229
    %300 = vmatpush.bf16.msra.mxu0 %v225
    %301 = vmatpush.bf16.msra.mxu0 %v221
    %302 = vmatpush.bf16.msra.mxu0 %v217
    %303 = vmatpush.bf16.msra.mxu0 %v213
    %304 = vmatpush.bf16.msra.mxu0 %v209
    %305 = vmatmul.bf16.gmra.mxu0 %v78
    %v306 = vpop.f32.mrf.mxu0
    %v307 = vadd.f32 0.0, %v306
    %v308 = vpop.f32.mrf.mxu0
    %309 = vdwg.mxu0
    %310 = vmatpush.bf16.msra.mxu0 %v238
    %311 = vmatpush.bf16.msra.mxu0 %v234
    %312 = vmatpush.bf16.msra.mxu0 %v230
    %313 = vmatpush.bf16.msra.mxu0 %v226
    %314 = vmatpush.bf16.msra.mxu0 %v222
    %315 = vmatpush.bf16.msra.mxu0 %v218
    %316 = vmatpush.bf16.msra.mxu0 %v214
    %317 = vmatpush.bf16.msra.mxu0 %v210
    %318 = vmatmul.bf16.gmra.mxu0 %v78
    %v319 = vpop.f32.mrf.mxu0
    %v320 = vadd.f32 0.0, %v319
    %v321 = vpop.f32.mrf.mxu0
    %322 = vdwg.mxu0
    %v323 = vmul.f32 %v281, 0.5
    %v324 = vmul.f32 %v294, 0.5
    %v325 = vmul.f32 %v307, 0.5
    %v326 = vmul.f32 %v320, 0.5
    %v327 = vtanh.pop %v323
    %v328 = vtanh.pop %v324
    %v329 = vtanh.pop %v325
    %v330 = vtanh.pop %v326
    %v331 = vmul.f32 %v327, 0.5
    %v332 = vmul.f32 %v328, 0.5
    %v333 = vmul.f32 %v329, 0.5
    %v334 = vmul.f32 %v330, 0.5
    %v335 = vadd.f32 %v331, 0.5
    %v336 = vadd.f32 %v332, 0.5
    %v337 = vadd.f32 %v333, 0.5
    %v338 = vadd.f32 %v334, 0.5
    %v339 = vmul.f32 %v281, %v335
    %v340 = vmul.f32 %v294, %v336
    %v341 = vmul.f32 %v307, %v337
    %v342 = vmul.f32 %v320, %v338
    %v343 = vmax.f32 %v339, 0.0
    %v344 = vmax.f32 %v340, 0.0
    %v345 = vmax.f32 %v341, 0.0
    %v346 = vmax.f32 %v342, 0.0
    %v347 = vmul.f32 %v343, 0.5
    %v348 = vmul.f32 %v344, 0.5
    %v349 = vmul.f32 %v345, 0.5
    %v350 = vmul.f32 %v346, 0.5
    %v351 = vtanh.pop %v347
    %v352 = vtanh.pop %v348
    %v353 = vtanh.pop %v349
    %v354 = vtanh.pop %v350
    %v355 = vmul.f32 %v351, 0.5
    %v356 = vmul.f32 %v352, 0.5
    %v357 = vmul.f32 %v353, 0.5
    %v358 = vmul.f32 %v354, 0.5
    %v359 = vadd.f32 %v355, 0.5
    %v360 = vadd.f32 %v356, 0.5
    %v361 = vadd.f32 %v357, 0.5
    %v362 = vadd.f32 %v358, 0.5
    %v363 = vmul.f32 %v343, %v359
    %v364 = vmul.f32 %v344, %v360
    %v365 = vmul.f32 %v345, %v361
    %v366 = vmul.f32 %v346, %v362
    %v367 = vpack.c.bf16 %v363, %v363
    %v368 = vpack.c.bf16 %v364, %v364
    %v369 = vpack.c.bf16 %v365, %v365
    %v370 = vpack.c.bf16 %v366, %v366
    %v371 = vld [vmem:[#allocation8] sm:$0xff]
    %v372 = vld [vmem:[#allocation8 + $0x8] sm:$0xff]
    %v373 = vld [vmem:[#allocation8 + $0x10] sm:$0xff]
    %v374 = vld [vmem:[#allocation8 + $0x18] sm:$0xff]
    %v375 = vld [vmem:[#allocation8 + $0x20] sm:$0xff]
    %v376 = vld [vmem:[#allocation8 + $0x28] sm:$0xff]
    %v377 = vld [vmem:[#allocation8 + $0x30] sm:$0xff]
    %v378 = vld [vmem:[#allocation8 + $0x38] sm:$0xff]
    %v379 = vld [vmem:[#allocation8 + $0x40] sm:$0xff]
    %v380 = vld [vmem:[#allocation8 + $0x48] sm:$0xff]
    %v381 = vld [vmem:[#allocation8 + $0x50] sm:$0xff]
    %v382 = vld [vmem:[#allocation8 + $0x58] sm:$0xff]
    %v383 = vld [vmem:[#allocation8 + $0x60] sm:$0xff]
    %v384 = vld [vmem:[#allocation8 + $0x68] sm:$0xff]
    %v385 = vld [vmem:[#allocation8 + $0x70] sm:$0xff]
    %v386 = vld [vmem:[#allocation8 + $0x78] sm:$0xff]
    %v387 = vld [vmem:[#allocation8 + $0x80] sm:$0xff]
    %v388 = vld [vmem:[#allocation8 + $0x88] sm:$0xff]
    %v389 = vld [vmem:[#allocation8 + $0x90] sm:$0xff]
    %v390 = vld [vmem:[#allocation8 + $0x98] sm:$0xff]
    %v391 = vld [vmem:[#allocation8 + $0xa0] sm:$0xff]
    %v392 = vld [vmem:[#allocation8 + $0xa8] sm:$0xff]
    %v393 = vld [vmem:[#allocation8 + $0xb0] sm:$0xff]
    %v394 = vld [vmem:[#allocation8 + $0xb8] sm:$0xff]
    %v395 = vld [vmem:[#allocation8 + $0xc0] sm:$0xff]
    %v396 = vld [vmem:[#allocation8 + $0xc8] sm:$0xff]
    %v397 = vld [vmem:[#allocation8 + $0xd0] sm:$0xff]
    %v398 = vld [vmem:[#allocation8 + $0xd8] sm:$0xff]
    %v399 = vld [vmem:[#allocation8 + $0xe0] sm:$0xff]
    %v400 = vld [vmem:[#allocation8 + $0xe8] sm:$0xff]
    %v401 = vld [vmem:[#allocation8 + $0xf0] sm:$0xff]
    %v402 = vld [vmem:[#allocation8 + $0xf8] sm:$0xff]
    %v403 = vld [vmem:[#allocation8 + $0x100] sm:$0xff]
    %v404 = vld [vmem:[#allocation8 + $0x108] sm:$0xff]
    %v405 = vld [vmem:[#allocation8 + $0x110] sm:$0xff]
    %v406 = vld [vmem:[#allocation8 + $0x118] sm:$0xff]
    %v407 = vld [vmem:[#allocation8 + $0x120] sm:$0xff]
    %v408 = vld [vmem:[#allocation8 + $0x128] sm:$0xff]
    %v409 = vld [vmem:[#allocation8 + $0x130] sm:$0xff]
    %v410 = vld [vmem:[#allocation8 + $0x138] sm:$0xff]
    %v411 = vld [vmem:[#allocation8 + $0x140] sm:$0xff]
    %v412 = vld [vmem:[#allocation8 + $0x148] sm:$0xff]
    %v413 = vld [vmem:[#allocation8 + $0x150] sm:$0xff]
    %v414 = vld [vmem:[#allocation8 + $0x158] sm:$0xff]
    %v415 = vld [vmem:[#allocation8 + $0x160] sm:$0xff]
    %v416 = vld [vmem:[#allocation8 + $0x168] sm:$0xff]
    %v417 = vld [vmem:[#allocation8 + $0x170] sm:$0xff]
    %v418 = vld [vmem:[#allocation8 + $0x178] sm:$0xff]
    %v419 = vld [vmem:[#allocation8 + $0x180] sm:$0xff]
    %v420 = vld [vmem:[#allocation8 + $0x188] sm:$0xff]
    %v421 = vld [vmem:[#allocation8 + $0x190] sm:$0xff]
    %v422 = vld [vmem:[#allocation8 + $0x198] sm:$0xff]
    %v423 = vld [vmem:[#allocation8 + $0x1a0] sm:$0xff]
    %v424 = vld [vmem:[#allocation8 + $0x1a8] sm:$0xff]
    %v425 = vld [vmem:[#allocation8 + $0x1b0] sm:$0xff]
    %v426 = vld [vmem:[#allocation8 + $0x1b8] sm:$0xff]
    %v427 = vld [vmem:[#allocation8 + $0x1c0] sm:$0xff]
    %v428 = vld [vmem:[#allocation8 + $0x1c8] sm:$0xff]
    %v429 = vld [vmem:[#allocation8 + $0x1d0] sm:$0xff]
    %v430 = vld [vmem:[#allocation8 + $0x1d8] sm:$0xff]
    %v431 = vld [vmem:[#allocation8 + $0x1e0] sm:$0xff]
    %v432 = vld [vmem:[#allocation8 + $0x1e8] sm:$0xff]
    %v433 = vld [vmem:[#allocation8 + $0x1f0] sm:$0xff]
    %v434 = vld [vmem:[#allocation8 + $0x1f8] sm:$0xff]
    %v435 = vld [vmem:[%s3] sm:$0x3]
    %v437 = vperm.slane %v435, 0
    %v438 = vperm.slane %v435, 1
    %v505 = vunpack.c.l.b16 %v371
    %v506 = vunpack.c.h.b16 %v371
    %v507 = vunpack.c.l.b16 %v372
    %v508 = vunpack.c.h.b16 %v372
    %v509 = vunpack.c.l.b16 %v373
    %v510 = vunpack.c.h.b16 %v373
    %v511 = vunpack.c.l.b16 %v374
    %v512 = vunpack.c.h.b16 %v374
    %v513 = vunpack.c.l.b16 %v375
    %v514 = vunpack.c.h.b16 %v375
    %v515 = vunpack.c.l.b16 %v376
    %v516 = vunpack.c.h.b16 %v376
    %v517 = vunpack.c.l.b16 %v377
    %v518 = vunpack.c.h.b16 %v377
    %v519 = vunpack.c.l.b16 %v378
    %v520 = vunpack.c.h.b16 %v378
    %v521 = vunpack.c.l.b16 %v379
    %v522 = vunpack.c.h.b16 %v379
    %v523 = vunpack.c.l.b16 %v380
    %v524 = vunpack.c.h.b16 %v380
    %v525 = vunpack.c.l.b16 %v381
    %v526 = vunpack.c.h.b16 %v381
    %v527 = vunpack.c.l.b16 %v382
    %v528 = vunpack.c.h.b16 %v382
    %v529 = vunpack.c.l.b16 %v383
    %v530 = vunpack.c.h.b16 %v383
    %v531 = vunpack.c.l.b16 %v384
    %v532 = vunpack.c.h.b16 %v384
    %v533 = vunpack.c.l.b16 %v385
    %v534 = vunpack.c.h.b16 %v385
    %v535 = vunpack.c.l.b16 %v386
    %v536 = vunpack.c.h.b16 %v386
    %v537 = vunpack.c.l.b16 %v387
    %v538 = vunpack.c.h.b16 %v387
    %v539 = vunpack.c.l.b16 %v388
    %v540 = vunpack.c.h.b16 %v388
    %v541 = vunpack.c.l.b16 %v389
    %v542 = vunpack.c.h.b16 %v389
    %v543 = vunpack.c.l.b16 %v390
    %v544 = vunpack.c.h.b16 %v390
    %v545 = vunpack.c.l.b16 %v391
    %v546 = vunpack.c.h.b16 %v391
    %v547 = vunpack.c.l.b16 %v392
    %v548 = vunpack.c.h.b16 %v392
    %v549 = vunpack.c.l.b16 %v393
    %v550 = vunpack.c.h.b16 %v393
    %v551 = vunpack.c.l.b16 %v394
    %v552 = vunpack.c.h.b16 %v394
    %v553 = vunpack.c.l.b16 %v395
    %v554 = vunpack.c.h.b16 %v395
    %v555 = vunpack.c.l.b16 %v396
    %v556 = vunpack.c.h.b16 %v396
    %v557 = vunpack.c.l.b16 %v397
    %v558 = vunpack.c.h.b16 %v397
    %v559 = vunpack.c.l.b16 %v398
    %v560 = vunpack.c.h.b16 %v398
    %v561 = vunpack.c.l.b16 %v399
    %v562 = vunpack.c.h.b16 %v399
    %v563 = vunpack.c.l.b16 %v400
    %v564 = vunpack.c.h.b16 %v400
    %v565 = vunpack.c.l.b16 %v401
    %v566 = vunpack.c.h.b16 %v401
    %v567 = vunpack.c.l.b16 %v402
    %v568 = vunpack.c.h.b16 %v402
    %v569 = vunpack.c.l.b16 %v403
    %v570 = vunpack.c.h.b16 %v403
    %v571 = vunpack.c.l.b16 %v404
    %v572 = vunpack.c.h.b16 %v404
    %v573 = vunpack.c.l.b16 %v405
    %v574 = vunpack.c.h.b16 %v405
    %v575 = vunpack.c.l.b16 %v406
    %v576 = vunpack.c.h.b16 %v406
    %v577 = vunpack.c.l.b16 %v407
    %v578 = vunpack.c.h.b16 %v407
    %v579 = vunpack.c.l.b16 %v408
    %v580 = vunpack.c.h.b16 %v408
    %v581 = vunpack.c.l.b16 %v409
    %v582 = vunpack.c.h.b16 %v409
    %v583 = vunpack.c.l.b16 %v410
    %v584 = vunpack.c.h.b16 %v410
    %v585 = vunpack.c.l.b16 %v411
    %v586 = vunpack.c.h.b16 %v411
    %v587 = vunpack.c.l.b16 %v412
    %v588 = vunpack.c.h.b16 %v412
    %v589 = vunpack.c.l.b16 %v413
    %v590 = vunpack.c.h.b16 %v413
    %v591 = vunpack.c.l.b16 %v414
    %v592 = vunpack.c.h.b16 %v414
    %v593 = vunpack.c.l.b16 %v415
    %v594 = vunpack.c.h.b16 %v415
    %v595 = vunpack.c.l.b16 %v416
    %v596 = vunpack.c.h.b16 %v416
    %v597 = vunpack.c.l.b16 %v417
    %v598 = vunpack.c.h.b16 %v417
    %v599 = vunpack.c.l.b16 %v418
    %v600 = vunpack.c.h.b16 %v418
    %v601 = vunpack.c.l.b16 %v419
    %v602 = vunpack.c.h.b16 %v419
    %v603 = vunpack.c.l.b16 %v420
    %v604 = vunpack.c.h.b16 %v420
    %v605 = vunpack.c.l.b16 %v421
    %v606 = vunpack.c.h.b16 %v421
    %v607 = vunpack.c.l.b16 %v422
    %v608 = vunpack.c.h.b16 %v422
    %v609 = vunpack.c.l.b16 %v423
    %v610 = vunpack.c.h.b16 %v423
    %v611 = vunpack.c.l.b16 %v424
    %v612 = vunpack.c.h.b16 %v424
    %v613 = vunpack.c.l.b16 %v425
    %v614 = vunpack.c.h.b16 %v425
    %v615 = vunpack.c.l.b16 %v426
    %v616 = vunpack.c.h.b16 %v426
    %v617 = vunpack.c.l.b16 %v427
    %v618 = vunpack.c.h.b16 %v427
    %v619 = vunpack.c.l.b16 %v428
    %v620 = vunpack.c.h.b16 %v428
    %v621 = vunpack.c.l.b16 %v429
    %v622 = vunpack.c.h.b16 %v429
    %v623 = vunpack.c.l.b16 %v430
    %v624 = vunpack.c.h.b16 %v430
    %v625 = vunpack.c.l.b16 %v431
    %v626 = vunpack.c.h.b16 %v431
    %v627 = vunpack.c.l.b16 %v432
    %v628 = vunpack.c.h.b16 %v432
    %v629 = vunpack.c.l.b16 %v433
    %v630 = vunpack.c.h.b16 %v433
    %v631 = vunpack.c.l.b16 %v434
    %v632 = vunpack.c.h.b16 %v434
    %v633 = vpack.c.b16 %v507, %v505
    %v634 = vpack.c.b16 %v508, %v506
    %v635 = vpack.c.b16 %v511, %v509
    %v636 = vpack.c.b16 %v512, %v510
    %v637 = vpack.c.b16 %v515, %v513
    %v638 = vpack.c.b16 %v516, %v514
    %v639 = vpack.c.b16 %v519, %v517
    %v640 = vpack.c.b16 %v520, %v518
    %v641 = vpack.c.b16 %v523, %v521
    %v642 = vpack.c.b16 %v524, %v522
    %v643 = vpack.c.b16 %v527, %v525
    %v644 = vpack.c.b16 %v528, %v526
    %v645 = vpack.c.b16 %v531, %v529
    %v646 = vpack.c.b16 %v532, %v530
    %v647 = vpack.c.b16 %v535, %v533
    %v648 = vpack.c.b16 %v536, %v534
    %v649 = vpack.c.b16 %v539, %v537
    %v650 = vpack.c.b16 %v540, %v538
    %v651 = vpack.c.b16 %v543, %v541
    %v652 = vpack.c.b16 %v544, %v542
    %v653 = vpack.c.b16 %v547, %v545
    %v654 = vpack.c.b16 %v548, %v546
    %v655 = vpack.c.b16 %v551, %v549
    %v656 = vpack.c.b16 %v552, %v550
    %v657 = vpack.c.b16 %v555, %v553
    %v658 = vpack.c.b16 %v556, %v554
    %v659 = vpack.c.b16 %v559, %v557
    %v660 = vpack.c.b16 %v560, %v558
    %v661 = vpack.c.b16 %v563, %v561
    %v662 = vpack.c.b16 %v564, %v562
    %v663 = vpack.c.b16 %v567, %v565
    %v664 = vpack.c.b16 %v568, %v566
    %v665 = vpack.c.b16 %v571, %v569
    %v666 = vpack.c.b16 %v572, %v570
    %v667 = vpack.c.b16 %v575, %v573
    %v668 = vpack.c.b16 %v576, %v574
    %v669 = vpack.c.b16 %v579, %v577
    %v670 = vpack.c.b16 %v580, %v578
    %v671 = vpack.c.b16 %v583, %v581
    %v672 = vpack.c.b16 %v584, %v582
    %v673 = vpack.c.b16 %v587, %v585
    %v674 = vpack.c.b16 %v588, %v586
    %v675 = vpack.c.b16 %v591, %v589
    %v676 = vpack.c.b16 %v592, %v590
    %v677 = vpack.c.b16 %v595, %v593
    %v678 = vpack.c.b16 %v596, %v594
    %v679 = vpack.c.b16 %v599, %v597
    %v680 = vpack.c.b16 %v600, %v598
    %v681 = vpack.c.b16 %v603, %v601
    %v682 = vpack.c.b16 %v604, %v602
    %v683 = vpack.c.b16 %v607, %v605
    %v684 = vpack.c.b16 %v608, %v606
    %v685 = vpack.c.b16 %v611, %v609
    %v686 = vpack.c.b16 %v612, %v610
    %v687 = vpack.c.b16 %v615, %v613
    %v688 = vpack.c.b16 %v616, %v614
    %v689 = vpack.c.b16 %v619, %v617
    %v690 = vpack.c.b16 %v620, %v618
    %v691 = vpack.c.b16 %v623, %v621
    %v692 = vpack.c.b16 %v624, %v622
    %v693 = vpack.c.b16 %v627, %v625
    %v694 = vpack.c.b16 %v628, %v626
    %v695 = vpack.c.b16 %v631, %v629
    %v696 = vpack.c.b16 %v632, %v630
    %761 = vmatpush.bf16.msra.mxu0 %v647
    %762 = vmatpush.bf16.msra.mxu0 %v645
    %763 = vmatpush.bf16.msra.mxu0 %v643
    %764 = vmatpush.bf16.msra.mxu0 %v641
    %765 = vmatpush.bf16.msra.mxu0 %v639
    %766 = vmatpush.bf16.msra.mxu0 %v637
    %767 = vmatpush.bf16.msra.mxu0 %v635
    %768 = vmatpush.bf16.msra.mxu0 %v633
    %769 = vmatmul.bf16.gmra.mxu0 %v367
    %v770 = vpop.f32.mrf.mxu0
    %v771 = vadd.f32 %v437, %v770
    %v772 = vpop.f32.mrf.mxu0
    %773 = vdwg.mxu0
    %774 = vmatpush.bf16.msra.mxu0 %v663
    %775 = vmatpush.bf16.msra.mxu0 %v661
    %776 = vmatpush.bf16.msra.mxu0 %v659
    %777 = vmatpush.bf16.msra.mxu0 %v657
    %778 = vmatpush.bf16.msra.mxu0 %v655
    %779 = vmatpush.bf16.msra.mxu0 %v653
    %780 = vmatpush.bf16.msra.mxu0 %v651
    %781 = vmatpush.bf16.msra.mxu0 %v649
    %782 = vmatmul.bf16.gmra.mxu0 %v368
    %v783 = vpop.f32.mrf.mxu0
    %v784 = vadd.f32 %v771, %v783
    %v785 = vpop.f32.mrf.mxu0
    %786 = vdwg.mxu0
    %787 = vmatpush.bf16.msra.mxu0 %v679
    %788 = vmatpush.bf16.msra.mxu0 %v677
    %789 = vmatpush.bf16.msra.mxu0 %v675
    %790 = vmatpush.bf16.msra.mxu0 %v673
    %791 = vmatpush.bf16.msra.mxu0 %v671
    %792 = vmatpush.bf16.msra.mxu0 %v669
    %793 = vmatpush.bf16.msra.mxu0 %v667
    %794 = vmatpush.bf16.msra.mxu0 %v665
    %795 = vmatmul.bf16.gmra.mxu0 %v369
    %v796 = vpop.f32.mrf.mxu0
    %v797 = vadd.f32 %v784, %v796
    %v798 = vpop.f32.mrf.mxu0
    %799 = vdwg.mxu0
    %800 = vmatpush.bf16.msra.mxu0 %v695
    %801 = vmatpush.bf16.msra.mxu0 %v693
    %802 = vmatpush.bf16.msra.mxu0 %v691
    %803 = vmatpush.bf16.msra.mxu0 %v689
    %804 = vmatpush.bf16.msra.mxu0 %v687
    %805 = vmatpush.bf16.msra.mxu0 %v685
    %806 = vmatpush.bf16.msra.mxu0 %v683
    %807 = vmatpush.bf16.msra.mxu0 %v681
    %808 = vmatmul.bf16.gmra.mxu0 %v370
    %v809 = vpop.f32.mrf.mxu0
    %v810 = vadd.f32 %v797, %v809
    %v811 = vpop.f32.mrf.mxu0
    %812 = vdwg.mxu0
    %813 = vmatpush.bf16.msra.mxu0 %v648
    %814 = vmatpush.bf16.msra.mxu0 %v646
    %815 = vmatpush.bf16.msra.mxu0 %v644
    %816 = vmatpush.bf16.msra.mxu0 %v642
    %817 = vmatpush.bf16.msra.mxu0 %v640
    %818 = vmatpush.bf16.msra.mxu0 %v638
    %819 = vmatpush.bf16.msra.mxu0 %v636
    %820 = vmatpush.bf16.msra.mxu0 %v634
    %821 = vmatmul.bf16.gmra.mxu0 %v367
    %v822 = vpop.f32.mrf.mxu0
    %v823 = vadd.f32 %v438, %v822
    %v824 = vpop.f32.mrf.mxu0
    %825 = vdwg.mxu0
    %826 = vmatpush.bf16.msra.mxu0 %v664
    %827 = vmatpush.bf16.msra.mxu0 %v662
    %828 = vmatpush.bf16.msra.mxu0 %v660
    %829 = vmatpush.bf16.msra.mxu0 %v658
    %830 = vmatpush.bf16.msra.mxu0 %v656
    %831 = vmatpush.bf16.msra.mxu0 %v654
    %832 = vmatpush.bf16.msra.mxu0 %v652
    %833 = vmatpush.bf16.msra.mxu0 %v650
    %834 = vmatmul.bf16.gmra.mxu0 %v368
    %v835 = vpop.f32.mrf.mxu0
    %v836 = vadd.f32 %v823, %v835
    %v837 = vpop.f32.mrf.mxu0
    %838 = vdwg.mxu0
    %839 = vmatpush.bf16.msra.mxu0 %v680
    %840 = vmatpush.bf16.msra.mxu0 %v678
    %841 = vmatpush.bf16.msra.mxu0 %v676
    %842 = vmatpush.bf16.msra.mxu0 %v674
    %843 = vmatpush.bf16.msra.mxu0 %v672
    %844 = vmatpush.bf16.msra.mxu0 %v670
    %845 = vmatpush.bf16.msra.mxu0 %v668
    %846 = vmatpush.bf16.msra.mxu0 %v666
    %847 = vmatmul.bf16.gmra.mxu0 %v369
    %v848 = vpop.f32.mrf.mxu0
    %v849 = vadd.f32 %v836, %v848
    %v850 = vpop.f32.mrf.mxu0
    %851 = vdwg.mxu0
    %852 = vmatpush.bf16.msra.mxu0 %v696
    %853 = vmatpush.bf16.msra.mxu0 %v694
    %854 = vmatpush.bf16.msra.mxu0 %v692
    %855 = vmatpush.bf16.msra.mxu0 %v690
    %856 = vmatpush.bf16.msra.mxu0 %v688
    %857 = vmatpush.bf16.msra.mxu0 %v686
    %858 = vmatpush.bf16.msra.mxu0 %v684
    %859 = vmatpush.bf16.msra.mxu0 %v682
    %860 = vmatmul.bf16.gmra.mxu0 %v370
    %v861 = vpop.f32.mrf.mxu0
    %v862 = vadd.f32 %v849, %v861
    %v863 = vpop.f32.mrf.mxu0
    %864 = vdwg.mxu0
    %v865 = vmul.f32 %v810, 0.5
    %v866 = vmul.f32 %v862, 0.5
    %v867 = vtanh.pop %v865
    %v868 = vtanh.pop %v866
    %v869 = vmul.f32 %v867, 0.5
    %v870 = vmul.f32 %v868, 0.5
    %v871 = vadd.f32 %v869, 0.5
    %v872 = vadd.f32 %v870, 0.5
    %v873 = vmul.f32 %v810, %v871
    %v874 = vmul.f32 %v862, %v872
    %v875 = vmax.f32 %v873, 0.0
    %v876 = vmax.f32 %v874, 0.0
    %877 = vst [vmem:[#allocation9] sm:$0xff] %v875
    %878 = vst [vmem:[#allocation9 + $0x8] sm:$0xff] %v876
    // Predicated region
    $region30: #{tpu_custom_call.1} parent=1 // pred_check
      _
    $region31: #{tpu_custom_call.1} parent=1 // pred_check_branch
      %880 = sbr.rel (0) target = $region33
    $region32: #{tpu_custom_call.1} parent=1 // pred_region
      %882 = vsyncadd [#allocation5], 0
      %s884 = sshll.u32 [#allocation9], 4
      %s885 = int_to_ptr.vmem [resolvable:$true] %s884
      %s886 = sshll.u32 %s4, 4
      %s887 = int_to_ptr.hbm [resolvable:$true] %s886
      %889 = dma.vmem_to_hbm [thread:$0]  %s885, 256, %s887, [#allocation5]
    $region33: #{tpu_custom_call.1} parent=1 // pred_fallthru
      _
    // Predicated region
    $region34: #{tpu_custom_call.1} parent=1 // pred_check
      _
    $region35: #{tpu_custom_call.1} parent=1 // pred_check_branch
      %891 = sbr.rel (0) target = $region37
    $region36: #{tpu_custom_call.1} parent=1 // pred_region
      %893 = dma.done [#allocation5], 256
    $region37: #{tpu_custom_call.1} parent=1 // pred_fallthru
      _
    %894 = vsyncpa [#allocation4], 1
    %895 = vsyncpa [#allocation7], 1
    %896 = vsyncpa [#allocation5], 1

</llo_original>
